<compile_context>
chip_gen: v7x
topology: tpu7x:2x2x1
jax: 0.10.0
libtpu: 0.0.40
codegen_flags: <defaults>
</compile_context>

<pallas_src>
import functools

import jax
import jax.numpy as jnp
from jax.experimental import pallas as pl
from jax.experimental.pallas import tpu as pltpu


def _round_up(x: int, m: int) -> int:
    return ((x + m - 1) // m) * m


def _sigmoid_f32(x):
    # Single-transcendental sigmoid: sigmoid(x) == 0.5 * tanh(0.5 * x) + 0.5
    # (one EUP tanh instead of exp + full-precision divide).  Kept in f32.
    return 0.5 * jnp.tanh(0.5 * x) + 0.5


def _deep_ae_kernel(*refs, n_layers, hdims, vdims):
    """Fused encode+decode for one batch tile.

    refs = (x_ref,
            W_0..W_{n-1},            # bf16, [in_i, out_i]  (encode)
            WT_0..WT_{n-1},          # bf16, [out_i, in_i]  (decode, pre-transposed)
            hb_ref, vb_ref,          # f32 packed biases, (n, max_pdim) each
            o_ref)
    hdims[i] = padded out_i, vdims[i] = padded in_i.
    """
    x_ref = refs[0]
    w_refs = refs[1:1 + n_layers]
    wt_refs = refs[1 + n_layers:1 + 2 * n_layers]
    hb_ref = refs[1 + 2 * n_layers]
    vb_ref = refs[2 + 2 * n_layers]
    o_ref = refs[3 + 2 * n_layers]

    bf16 = jnp.bfloat16

    # ---- encode: sigmoid between layers, keep the LAST pre-activation ----
    x = x_ref[...]  # already bf16
    act = None
    for i in range(n_layers):
        act = jnp.dot(x, w_refs[i][...], preferred_element_type=jnp.float32)
        act = act + hb_ref[i:i + 1, 0:hdims[i]]
        if i < n_layers - 1:
            x = _sigmoid_f32(act).astype(bf16)
    x = act.astype(bf16)  # PyTorch encode() returns the pre-sigmoid top activation

    # ---- decode: x @ W_i.T + v_bias_i, sigmoid every layer (reversed order) ----
    for i in reversed(range(n_layers)):
        act = jnp.dot(x, wt_refs[i][...], preferred_element_type=jnp.float32)
        act = act + vb_ref[i:i + 1, 0:vdims[i]]
        x = _sigmoid_f32(act)
        if i > 0:
            x = x.astype(bf16)

    o_ref[...] = x.astype(o_ref.dtype)


def _tpu_generation_params():
    """Returns (mxu_row_alignment, per-core VMEM budget bytes) for the local TPU."""
    try:
        kind = jax.devices()[0].device_kind.lower()
    except Exception:  # pragma: no cover
        kind = ""
    if "v5 lite" in kind or "v5e" in kind or "v5lite" in kind:
        return 128, 100 << 20      # v5e: 4x128^2 MXU, 128 MiB VMEM
    if "v6" in kind:
        return 256, 100 << 20      # v6e: 2x256^2 MXU, 128 MiB VMEM
    # v7x ("tpu7x") and unknown: conservative 64 MiB/TC budget, 256-row MXU.
    return 256, 56 << 20


def _select_batch_tiling(M, pdims, n_layers):
    """Pick the batch tile bm from the per-core VMEM budget, MXU-aligned."""
    align, vmem_budget = _tpu_generation_params()
    max_pdim = max(pdims)
    # Resident, single-buffered operands: bf16 encode weights + bf16 pre-transposed
    # decode weights + two packed f32 bias arrays.
    resident = 2 * 2 * sum(pdims[i] * pdims[i + 1] for i in range(n_layers))
    resident += 2 * n_layers * max_pdim * 4
    # Per-batch-row VMEM: double-buffered bf16 input + output tiles plus live
    # f32/bf16 activation slabs (with slack).
    per_row = 2 * pdims[0] * 2 + 2 * pdims[0] * 2 + 6 * max_pdim * 4
    avail = vmem_budget - resident - (4 << 20)
    if avail < per_row * align:
        bm_cap = align
    else:
        bm_cap = min(2048, (avail // per_row) // align * align)

    Mp8 = _round_up(M, 8)
    if Mp8 <= align:
        bm = Mp8                    # tiny batch: one grid step, minimal row padding
    else:
        bm = min(bm_cap, _round_up(M, align))
    Mp = _round_up(M, bm)
    return bm, Mp, Mp // bm, resident, per_row, vmem_budget


def deep_ae_forward(v, Ws, h_biases, v_biases):
    """Replicates DeepAE.forward(v) = decode(encode(v)) with one fused kernel."""
    n = len(Ws)
    dims = [Ws[0].shape[0]] + [w.shape[1] for w in Ws]
    pdims = [_round_up(d, 128) for d in dims]       # lane-dense feature widths
    max_pdim = max(pdims)
    M = v.shape[0]

    f32, bf16 = jnp.float32, jnp.bfloat16

    # ---- host-side one-time padding / packing / dtype prep (exact zero pad) ----
    Ws_p = [
        jnp.pad(
            Ws[i].astype(f32),
            ((0, pdims[i] - dims[i]), (0, pdims[i + 1] - dims[i + 1])),
        ).astype(bf16)
        for i in range(n)
    ]
    WsT_p = [jnp.transpose(w) for w in Ws_p]        # decode weights, transposed once
    hb_packed = jnp.stack(
        [jnp.pad(h_biases[i].astype(f32), (0, max_pdim - dims[i + 1]))
         for i in range(n)])
    vb_packed = jnp.stack(
        [jnp.pad(v_biases[i].astype(f32), (0, max_pdim - dims[i]))
         for i in range(n)])

    bm, Mp, n_m, resident_b, per_row_b, vmem_budget = _select_batch_tiling(M, pdims, n)
    v_p = jnp.pad(
        v.astype(f32), ((0, Mp - M), (0, pdims[0] - dims[0]))
    ).astype(bf16)

    kernel = functools.partial(
        _deep_ae_kernel,
        n_layers=n,
        hdims=tuple(pdims[1:]),
        vdims=tuple(pdims[:-1]),
    )

    # Explicit scoped-VMEM limit: resident weights/biases + batch tiles + slack,
    # never below the single-buffered need, capped near the generation budget.
    vmem_limit = int(
        min(2 * resident_b + per_row_b * bm + (16 << 20), vmem_budget + (4 << 20))
    )

    def build(single_buffer_invariants):
        def inv_spec(shape):
            # Grid-invariant operand: block index never changes, so a single
            # VMEM buffer suffices (halves resident weight footprint).
            if single_buffer_invariants:
                return pl.BlockSpec(shape, lambda i: (0, 0),
                                    pipeline_mode=pl.Buffered(1))
            return pl.BlockSpec(shape, lambda i: (0, 0))

        in_specs = [pl.BlockSpec((bm, pdims[0]), lambda i: (i, 0))]
        in_specs += [inv_spec(w.shape) for w in Ws_p]
        in_specs += [inv_spec(w.shape) for w in WsT_p]
        in_specs += [inv_spec(hb_packed.shape), inv_spec(vb_packed.shape)]

        return pl.pallas_call(
            kernel,
            out_shape=jax.ShapeDtypeStruct((Mp, pdims[0]), bf16),
            grid=(n_m,),
            in_specs=in_specs,
            out_specs=pl.BlockSpec((bm, pdims[0]), lambda i: (i, 0)),
            compiler_params=pltpu.CompilerParams(
                dimension_semantics=("parallel",),
                vmem_limit_bytes=vmem_limit,
            ),
        )

    args = (v_p, *Ws_p, *WsT_p, hb_packed, vb_packed)
    try:
        out_p = build(True)(*args)
    except Exception:
        # Fallback for jax versions that reject Buffered(1): default buffering.
        out_p = build(False)(*args)

    return out_p[:M, : dims[0]]


def _reference_forward(v, Ws, h_biases, v_biases):
    """Pure-JAX f32 reference mirroring the PyTorch DeepAE.forward."""
    n = len(Ws)
    p_v = v
    activation = None
    for i in range(n):
        activation = p_v @ Ws[i] + h_biases[i]
        p_v = jax.nn.sigmoid(activation)
    p_h = activation
    for i in range(n):
        j = n - 1 - i
        act = p_h @ Ws[j].T + v_biases[j]
        p_h = jax.nn.sigmoid(act)
    return p_h


if __name__ == "__main__":
    # Two stacked RBMs: 32 -> 64 -> 16 (visible/hidden dims per RBM).
    dims = [32, 64, 16]
    batch = 8

    key = jax.random.PRNGKey(0)
    keys = jax.random.split(key, 2 * (len(dims) - 1) + 1)

    Ws, h_biases, v_biases = [], [], []
    kidx = 0
    for i in range(len(dims) - 1):
        Ws.append(
            0.1 * jax.random.normal(keys[kidx], (dims[i], dims[i + 1]), jnp.float32)
        )
        kidx += 1
        h_biases.append(
            0.05 * jax.random.normal(keys[kidx], (dims[i + 1],), jnp.float32)
        )
        kidx += 1
        v_biases.append(
            jnp.linspace(-0.1, 0.1, dims[i], dtype=jnp.float32) * (i + 1)
        )

    v = jax.random.uniform(keys[kidx], (batch, dims[0]), jnp.float32)

    out = deep_ae_forward(v, Ws, h_biases, v_biases)
    out = jax.block_until_ready(out)

    ref = _reference_forward(v, Ws, h_biases, v_biases)
    assert out.shape == (batch, dims[0])
    # bf16 matmul operands + bf16 output => relaxed tolerance vs f32 reference.
    max_err = float(jnp.max(jnp.abs(out.astype(jnp.float32) - ref)))
    assert max_err < 5e-2, f"mismatch vs reference: max abs err {max_err}"

    print("KERNEL_OK")
</pallas_src>

<mosaic_0001>
module attributes {stable_mosaic.version = 11 : i64} {
  func.func @_deep_ae_kernel(%arg0: i32, %arg1: memref<8x128xbf16, #tpu.memory_space<vmem>>, %arg2: memref<128x128xbf16, #tpu.memory_space<vmem>>, %arg3: memref<128x128xbf16, #tpu.memory_space<vmem>>, %arg4: memref<128x128xbf16, #tpu.memory_space<vmem>>, %arg5: memref<128x128xbf16, #tpu.memory_space<vmem>>, %arg6: memref<2x128xf32, #tpu.memory_space<vmem>>, %arg7: memref<2x128xf32, #tpu.memory_space<vmem>>, %arg8: memref<8x128xbf16, #tpu.memory_space<vmem>>) attributes {dimension_semantics = [#tpu.dimension_semantics<parallel>], iteration_bounds = array<i64: 1>, scalar_prefetch = 0 : i64, scratch_operands = 0 : i64, tpu.core_type = #tpu.core_type<tc>, window_params = [{transform_indices = @transform_0, window_bounds = array<i64: 8, 128>}, {pipeline_mode = #tpu.pipeline_mode<synchronous>, transform_indices = @transform_1, window_bounds = array<i64: 128, 128>}, {pipeline_mode = #tpu.pipeline_mode<synchronous>, transform_indices = @transform_2, window_bounds = array<i64: 128, 128>}, {pipeline_mode = #tpu.pipeline_mode<synchronous>, transform_indices = @transform_3, window_bounds = array<i64: 128, 128>}, {pipeline_mode = #tpu.pipeline_mode<synchronous>, transform_indices = @transform_4, window_bounds = array<i64: 128, 128>}, {pipeline_mode = #tpu.pipeline_mode<synchronous>, transform_indices = @transform_5, window_bounds = array<i64: 2, 128>}, {pipeline_mode = #tpu.pipeline_mode<synchronous>, transform_indices = @transform_6, window_bounds = array<i64: 2, 128>}, {transform_indices = @transform_7, window_bounds = array<i64: 8, 128>}]} {
    %c0 = arith.constant 0 : index
    %c0_0 = arith.constant 0 : index
    %0 = vector.load %arg1[%c0, %c0_0] : memref<8x128xbf16, #tpu.memory_space<vmem>>, vector<8x128xbf16>
    %c0_1 = arith.constant 0 : index
    %c0_2 = arith.constant 0 : index
    %1 = vector.load %arg2[%c0_1, %c0_2] : memref<128x128xbf16, #tpu.memory_space<vmem>>, vector<128x128xbf16>
    %cst = arith.constant dense<0.000000e+00> : vector<8x128xf32>
    %2 = tpu.matmul %0, %1, %cst {dimension_numbers = #tpu.dot_dimension_numbers<[1], [0], [0], [1], [0, 0, 1, 1], [], []>} : vector<8x128xbf16>, vector<128x128xbf16>, vector<8x128xf32> -> vector<8x128xf32>
    %c0_3 = arith.constant 0 : index
    %c0_4 = arith.constant 0 : index
    %3 = vector.load %arg6[%c0_3, %c0_4] : memref<2x128xf32, #tpu.memory_space<vmem>>, vector<1x128xf32>
    %4 = vector.broadcast %3 : vector<1x128xf32> to vector<8x128xf32>
    %5 = arith.addf %2, %4 : vector<8x128xf32>
    %cst_5 = arith.constant 5.000000e-01 : f32
    %6 = vector.broadcast %cst_5 : f32 to vector<8x128xf32>
    %7 = arith.mulf %6, %5 : vector<8x128xf32>
    %8 = math.tanh %7 : vector<8x128xf32>
    %cst_6 = arith.constant 5.000000e-01 : f32
    %9 = vector.broadcast %cst_6 : f32 to vector<8x128xf32>
    %10 = arith.mulf %9, %8 : vector<8x128xf32>
    %cst_7 = arith.constant 5.000000e-01 : f32
    %11 = vector.broadcast %cst_7 : f32 to vector<8x128xf32>
    %12 = arith.addf %10, %11 : vector<8x128xf32>
    %13 = arith.truncf %12 : vector<8x128xf32> to vector<8x128xbf16>
    %c0_8 = arith.constant 0 : index
    %c0_9 = arith.constant 0 : index
    %14 = vector.load %arg3[%c0_8, %c0_9] : memref<128x128xbf16, #tpu.memory_space<vmem>>, vector<128x128xbf16>
    %cst_10 = arith.constant dense<0.000000e+00> : vector<8x128xf32>
    %15 = tpu.matmul %13, %14, %cst_10 {dimension_numbers = #tpu.dot_dimension_numbers<[1], [0], [0], [1], [0, 0, 1, 1], [], []>} : vector<8x128xbf16>, vector<128x128xbf16>, vector<8x128xf32> -> vector<8x128xf32>
    %c1 = arith.constant 1 : index
    %c0_11 = arith.constant 0 : index
    %16 = vector.load %arg6[%c1, %c0_11] : memref<2x128xf32, #tpu.memory_space<vmem>>, vector<1x128xf32>
    %17 = vector.broadcast %16 : vector<1x128xf32> to vector<8x128xf32>
    %18 = arith.addf %15, %17 : vector<8x128xf32>
    %19 = arith.truncf %18 : vector<8x128xf32> to vector<8x128xbf16>
    %c0_12 = arith.constant 0 : index
    %c0_13 = arith.constant 0 : index
    %20 = vector.load %arg5[%c0_12, %c0_13] : memref<128x128xbf16, #tpu.memory_space<vmem>>, vector<128x128xbf16>
    %cst_14 = arith.constant dense<0.000000e+00> : vector<8x128xf32>
    %21 = tpu.matmul %19, %20, %cst_14 {dimension_numbers = #tpu.dot_dimension_numbers<[1], [0], [0], [1], [0, 0, 1, 1], [], []>} : vector<8x128xbf16>, vector<128x128xbf16>, vector<8x128xf32> -> vector<8x128xf32>
    %c1_15 = arith.constant 1 : index
    %c0_16 = arith.constant 0 : index
    %22 = vector.load %arg7[%c1_15, %c0_16] : memref<2x128xf32, #tpu.memory_space<vmem>>, vector<1x128xf32>
    %23 = vector.broadcast %22 : vector<1x128xf32> to vector<8x128xf32>
    %24 = arith.addf %21, %23 : vector<8x128xf32>
    %cst_17 = arith.constant 5.000000e-01 : f32
    %25 = vector.broadcast %cst_17 : f32 to vector<8x128xf32>
    %26 = arith.mulf %25, %24 : vector<8x128xf32>
    %27 = math.tanh %26 : vector<8x128xf32>
    %cst_18 = arith.constant 5.000000e-01 : f32
    %28 = vector.broadcast %cst_18 : f32 to vector<8x128xf32>
    %29 = arith.mulf %28, %27 : vector<8x128xf32>
    %cst_19 = arith.constant 5.000000e-01 : f32
    %30 = vector.broadcast %cst_19 : f32 to vector<8x128xf32>
    %31 = arith.addf %29, %30 : vector<8x128xf32>
    %32 = arith.truncf %31 : vector<8x128xf32> to vector<8x128xbf16>
    %c0_20 = arith.constant 0 : index
    %c0_21 = arith.constant 0 : index
    %33 = vector.load %arg4[%c0_20, %c0_21] : memref<128x128xbf16, #tpu.memory_space<vmem>>, vector<128x128xbf16>
    %cst_22 = arith.constant dense<0.000000e+00> : vector<8x128xf32>
    %34 = tpu.matmul %32, %33, %cst_22 {dimension_numbers = #tpu.dot_dimension_numbers<[1], [0], [0], [1], [0, 0, 1, 1], [], []>} : vector<8x128xbf16>, vector<128x128xbf16>, vector<8x128xf32> -> vector<8x128xf32>
    %c0_23 = arith.constant 0 : index
    %c0_24 = arith.constant 0 : index
    %35 = vector.load %arg7[%c0_23, %c0_24] : memref<2x128xf32, #tpu.memory_space<vmem>>, vector<1x128xf32>
    %36 = vector.broadcast %35 : vector<1x128xf32> to vector<8x128xf32>
    %37 = arith.addf %34, %36 : vector<8x128xf32>
    %cst_25 = arith.constant 5.000000e-01 : f32
    %38 = vector.broadcast %cst_25 : f32 to vector<8x128xf32>
    %39 = arith.mulf %38, %37 : vector<8x128xf32>
    %40 = math.tanh %39 : vector<8x128xf32>
    %cst_26 = arith.constant 5.000000e-01 : f32
    %41 = vector.broadcast %cst_26 : f32 to vector<8x128xf32>
    %42 = arith.mulf %41, %40 : vector<8x128xf32>
    %cst_27 = arith.constant 5.000000e-01 : f32
    %43 = vector.broadcast %cst_27 : f32 to vector<8x128xf32>
    %44 = arith.addf %42, %43 : vector<8x128xf32>
    %45 = arith.truncf %44 : vector<8x128xf32> to vector<8x128xbf16>
    %c0_28 = arith.constant 0 : index
    %c0_29 = arith.constant 0 : index
    %46 = vector.load %arg8[%c0_28, %c0_29] : memref<8x128xbf16, #tpu.memory_space<vmem>>, vector<8x128xbf16>
    tpu.vector_store %arg8[%c0_28, %c0_29], %45 {strides = array<i32>} : memref<8x128xbf16, #tpu.memory_space<vmem>>, vector<8x128xbf16>,
    return
  }
  func.func @transform_0(%arg0: i32) -> (i32, i32) {
    %c0_i32 = arith.constant 0 : i32
    %c0_i32_0 = arith.constant 0 : i32
    return %arg0, %c0_i32 : i32, i32
  }
  func.func @transform_1(%arg0: i32) -> (i32, i32) {
    %c0_i32 = arith.constant 0 : i32
    %c0_i32_0 = arith.constant 0 : i32
    %c0_i32_1 = arith.constant 0 : i32
    return %c0_i32, %c0_i32_0 : i32, i32
  }
  func.func @transform_2(%arg0: i32) -> (i32, i32) {
    %c0_i32 = arith.constant 0 : i32
    %c0_i32_0 = arith.constant 0 : i32
    %c0_i32_1 = arith.constant 0 : i32
    return %c0_i32, %c0_i32_0 : i32, i32
  }
  func.func @transform_3(%arg0: i32) -> (i32, i32) {
    %c0_i32 = arith.constant 0 : i32
    %c0_i32_0 = arith.constant 0 : i32
    %c0_i32_1 = arith.constant 0 : i32
    return %c0_i32, %c0_i32_0 : i32, i32
  }
  func.func @transform_4(%arg0: i32) -> (i32, i32) {
    %c0_i32 = arith.constant 0 : i32
    %c0_i32_0 = arith.constant 0 : i32
    %c0_i32_1 = arith.constant 0 : i32
    return %c0_i32, %c0_i32_0 : i32, i32
  }
  func.func @transform_5(%arg0: i32) -> (i32, i32) {
    %c0_i32 = arith.constant 0 : i32
    %c0_i32_0 = arith.constant 0 : i32
    %c0_i32_1 = arith.constant 0 : i32
    return %c0_i32, %c0_i32_0 : i32, i32
  }
  func.func @transform_6(%arg0: i32) -> (i32, i32) {
    %c0_i32 = arith.constant 0 : i32
    %c0_i32_0 = arith.constant 0 : i32
    %c0_i32_1 = arith.constant 0 : i32
    return %c0_i32, %c0_i32_0 : i32, i32
  }
  func.func @transform_7(%arg0: i32) -> (i32, i32) {
    %c0_i32 = arith.constant 0 : i32
    %c0_i32_0 = arith.constant 0 : i32
    return %arg0, %c0_i32 : i32, i32
  }
}

module attributes {stable_mosaic.version = 11 : i64} {
  func.func @_deep_ae_kernel(%arg0: i32, %arg1: memref<8x128xbf16, #tpu.memory_space<vmem>>, %arg2: memref<128x128xbf16, #tpu.memory_space<vmem>>, %arg3: memref<128x128xbf16, #tpu.memory_space<vmem>>, %arg4: memref<128x128xbf16, #tpu.memory_space<vmem>>, %arg5: memref<128x128xbf16, #tpu.memory_space<vmem>>, %arg6: memref<2x128xf32, #tpu.memory_space<vmem>>, %arg7: memref<2x128xf32, #tpu.memory_space<vmem>>, %arg8: memref<8x128xbf16, #tpu.memory_space<vmem>>) attributes {dimension_semantics = [#tpu.dimension_semantics<parallel>], iteration_bounds = array<i64: 1>, scalar_prefetch = 0 : i64, scratch_operands = 0 : i64, tpu.core_type = #tpu.core_type<tc>, window_params = [{transform_indices = @transform_0, window_bounds = array<i64: 8, 128>}, {pipeline_mode = #tpu.pipeline_mode<synchronous>, transform_indices = @transform_1, window_bounds = array<i64: 128, 128>}, {pipeline_mode = #tpu.pipeline_mode<synchronous>, transform_indices = @transform_2, window_bounds = array<i64: 128, 128>}, {pipeline_mode = #tpu.pipeline_mode<synchronous>, transform_indices = @transform_3, window_bounds = array<i64: 128, 128>}, {pipeline_mode = #tpu.pipeline_mode<synchronous>, transform_indices = @transform_4, window_bounds = array<i64: 128, 128>}, {pipeline_mode = #tpu.pipeline_mode<synchronous>, transform_indices = @transform_5, window_bounds = array<i64: 2, 128>}, {pipeline_mode = #tpu.pipeline_mode<synchronous>, transform_indices = @transform_6, window_bounds = array<i64: 2, 128>}, {transform_indices = @transform_7, window_bounds = array<i64: 8, 128>}]} {
    %c0 = arith.constant 0 : index
    %c0_0 = arith.constant 0 : index
    %0 = vector.load %arg1[%c0, %c0_0] : memref<8x128xbf16, #tpu.memory_space<vmem>>, vector<8x128xbf16>
    %c0_1 = arith.constant 0 : index
    %c0_2 = arith.constant 0 : index
    %1 = vector.load %arg2[%c0_1, %c0_2] : memref<128x128xbf16, #tpu.memory_space<vmem>>, vector<128x128xbf16>
    %cst = arith.constant dense<0.000000e+00> : vector<8x128xf32>
    %2 = tpu.matmul %0, %1, %cst {dimension_numbers = #tpu.dot_dimension_numbers<[1], [0], [0], [1], [0, 0, 1, 1], [], []>} : vector<8x128xbf16>, vector<128x128xbf16>, vector<8x128xf32> -> vector<8x128xf32>
    %c0_3 = arith.constant 0 : index
    %c0_4 = arith.constant 0 : index
    %3 = vector.load %arg6[%c0_3, %c0_4] : memref<2x128xf32, #tpu.memory_space<vmem>>, vector<1x128xf32>
    %4 = vector.broadcast %3 : vector<1x128xf32> to vector<8x128xf32>
    %5 = arith.addf %2, %4 : vector<8x128xf32>
    %cst_5 = arith.constant 5.000000e-01 : f32
    %6 = vector.broadcast %cst_5 : f32 to vector<8x128xf32>
    %7 = arith.mulf %6, %5 : vector<8x128xf32>
    %8 = math.tanh %7 : vector<8x128xf32>
    %cst_6 = arith.constant 5.000000e-01 : f32
    %9 = vector.broadcast %cst_6 : f32 to vector<8x128xf32>
    %10 = arith.mulf %9, %8 : vector<8x128xf32>
    %cst_7 = arith.constant 5.000000e-01 : f32
    %11 = vector.broadcast %cst_7 : f32 to vector<8x128xf32>
    %12 = arith.addf %10, %11 : vector<8x128xf32>
    %13 = arith.truncf %12 : vector<8x128xf32> to vector<8x128xbf16>
    %c0_8 = arith.constant 0 : index
    %c0_9 = arith.constant 0 : index
    %14 = vector.load %arg3[%c0_8, %c0_9] : memref<128x128xbf16, #tpu.memory_space<vmem>>, vector<128x128xbf16>
    %cst_10 = arith.constant dense<0.000000e+00> : vector<8x128xf32>
    %15 = tpu.matmul %13, %14, %cst_10 {dimension_numbers = #tpu.dot_dimension_numbers<[1], [0], [0], [1], [0, 0, 1, 1], [], []>} : vector<8x128xbf16>, vector<128x128xbf16>, vector<8x128xf32> -> vector<8x128xf32>
    %c1 = arith.constant 1 : index
    %c0_11 = arith.constant 0 : index
    %16 = vector.load %arg6[%c1, %c0_11] : memref<2x128xf32, #tpu.memory_space<vmem>>, vector<1x128xf32>
    %17 = vector.broadcast %16 : vector<1x128xf32> to vector<8x128xf32>
    %18 = arith.addf %15, %17 : vector<8x128xf32>
    %19 = arith.truncf %18 : vector<8x128xf32> to vector<8x128xbf16>
    %c0_12 = arith.constant 0 : index
    %c0_13 = arith.constant 0 : index
    %20 = vector.load %arg5[%c0_12, %c0_13] : memref<128x128xbf16, #tpu.memory_space<vmem>>, vector<128x128xbf16>
    %cst_14 = arith.constant dense<0.000000e+00> : vector<8x128xf32>
    %21 = tpu.matmul %19, %20, %cst_14 {dimension_numbers = #tpu.dot_dimension_numbers<[1], [0], [0], [1], [0, 0, 1, 1], [], []>} : vector<8x128xbf16>, vector<128x128xbf16>, vector<8x128xf32> -> vector<8x128xf32>
    %c1_15 = arith.constant 1 : index
    %c0_16 = arith.constant 0 : index
    %22 = vector.load %arg7[%c1_15, %c0_16] : memref<2x128xf32, #tpu.memory_space<vmem>>, vector<1x128xf32>
    %23 = vector.broadcast %22 : vector<1x128xf32> to vector<8x128xf32>
    %24 = arith.addf %21, %23 : vector<8x128xf32>
    %cst_17 = arith.constant 5.000000e-01 : f32
    %25 = vector.broadcast %cst_17 : f32 to vector<8x128xf32>
    %26 = arith.mulf %25, %24 : vector<8x128xf32>
    %27 = math.tanh %26 : vector<8x128xf32>
    %cst_18 = arith.constant 5.000000e-01 : f32
    %28 = vector.broadcast %cst_18 : f32 to vector<8x128xf32>
    %29 = arith.mulf %28, %27 : vector<8x128xf32>
    %cst_19 = arith.constant 5.000000e-01 : f32
    %30 = vector.broadcast %cst_19 : f32 to vector<8x128xf32>
    %31 = arith.addf %29, %30 : vector<8x128xf32>
    %32 = arith.truncf %31 : vector<8x128xf32> to vector<8x128xbf16>
    %c0_20 = arith.constant 0 : index
    %c0_21 = arith.constant 0 : index
    %33 = vector.load %arg4[%c0_20, %c0_21] : memref<128x128xbf16, #tpu.memory_space<vmem>>, vector<128x128xbf16>
    %cst_22 = arith.constant dense<0.000000e+00> : vector<8x128xf32>
    %34 = tpu.matmul %32, %33, %cst_22 {dimension_numbers = #tpu.dot_dimension_numbers<[1], [0], [0], [1], [0, 0, 1, 1], [], []>} : vector<8x128xbf16>, vector<128x128xbf16>, vector<8x128xf32> -> vector<8x128xf32>
    %c0_23 = arith.constant 0 : index
    %c0_24 = arith.constant 0 : index
    %35 = vector.load %arg7[%c0_23, %c0_24] : memref<2x128xf32, #tpu.memory_space<vmem>>, vector<1x128xf32>
    %36 = vector.broadcast %35 : vector<1x128xf32> to vector<8x128xf32>
    %37 = arith.addf %34, %36 : vector<8x128xf32>
    %cst_25 = arith.constant 5.000000e-01 : f32
    %38 = vector.broadcast %cst_25 : f32 to vector<8x128xf32>
    %39 = arith.mulf %38, %37 : vector<8x128xf32>
    %40 = math.tanh %39 : vector<8x128xf32>
    %cst_26 = arith.constant 5.000000e-01 : f32
    %41 = vector.broadcast %cst_26 : f32 to vector<8x128xf32>
    %42 = arith.mulf %41, %40 : vector<8x128xf32>
    %cst_27 = arith.constant 5.000000e-01 : f32
    %43 = vector.broadcast %cst_27 : f32 to vector<8x128xf32>
    %44 = arith.addf %42, %43 : vector<8x128xf32>
    %45 = arith.truncf %44 : vector<8x128xf32> to vector<8x128xbf16>
    %c0_28 = arith.constant 0 : index
    %c0_29 = arith.constant 0 : index
    %46 = vector.load %arg8[%c0_28, %c0_29] : memref<8x128xbf16, #tpu.memory_space<vmem>>, vector<8x128xbf16>
    tpu.vector_store %arg8[%c0_28, %c0_29], %45 {strides = array<i32>} : memref<8x128xbf16, #tpu.memory_space<vmem>>, vector<8x128xbf16>,
    return
  }
  func.func @transform_0(%arg0: i32) -> (i32, i32) {
    %c0_i32 = arith.constant 0 : i32
    %c0_i32_0 = arith.constant 0 : i32
    return %arg0, %c0_i32 : i32, i32
  }
  func.func @transform_1(%arg0: i32) -> (i32, i32) {
    %c0_i32 = arith.constant 0 : i32
    %c0_i32_0 = arith.constant 0 : i32
    %c0_i32_1 = arith.constant 0 : i32
    return %c0_i32, %c0_i32_0 : i32, i32
  }
  func.func @transform_2(%arg0: i32) -> (i32, i32) {
    %c0_i32 = arith.constant 0 : i32
    %c0_i32_0 = arith.constant 0 : i32
    %c0_i32_1 = arith.constant 0 : i32
    return %c0_i32, %c0_i32_0 : i32, i32
  }
  func.func @transform_3(%arg0: i32) -> (i32, i32) {
    %c0_i32 = arith.constant 0 : i32
    %c0_i32_0 = arith.constant 0 : i32
    %c0_i32_1 = arith.constant 0 : i32
    return %c0_i32, %c0_i32_0 : i32, i32
  }
  func.func @transform_4(%arg0: i32) -> (i32, i32) {
    %c0_i32 = arith.constant 0 : i32
    %c0_i32_0 = arith.constant 0 : i32
    %c0_i32_1 = arith.constant 0 : i32
    return %c0_i32, %c0_i32_0 : i32, i32
  }
  func.func @transform_5(%arg0: i32) -> (i32, i32) {
    %c0_i32 = arith.constant 0 : i32
    %c0_i32_0 = arith.constant 0 : i32
    %c0_i32_1 = arith.constant 0 : i32
    return %c0_i32, %c0_i32_0 : i32, i32
  }
  func.func @transform_6(%arg0: i32) -> (i32, i32) {
    %c0_i32 = arith.constant 0 : i32
    %c0_i32_0 = arith.constant 0 : i32
    %c0_i32_1 = arith.constant 0 : i32
    return %c0_i32, %c0_i32_0 : i32, i32
  }
  func.func @transform_7(%arg0: i32) -> (i32, i32) {
    %c0_i32 = arith.constant 0 : i32
    %c0_i32_0 = arith.constant 0 : i32
    return %arg0, %c0_i32 : i32, i32
  }
}

</mosaic_0001>

<llo_original>
// kernel: tpu_custom_call.1
$region0: #{tpu_custom_call.1}
  #allocation0 [shape = 'u32[]', space=smem, size = 0x4, offset = 0x4, fixed_abs, tag = 'smem constant byte address 0x4 - core index']
  #allocation1 [shape = 'u32[144,128]{1,0:T(1,128)}', space=vmem, size = 0x12000, scoped, tag = 'internal scratch']
  %s0 = inlined_call_operand.hbm [shape: bf16[8,128], index: 0, kind: input, shape index: {}]
  %s1 = inlined_call_operand.hbm [shape: bf16[128,128], index: 1, kind: input, shape index: {}]
  %s2 = inlined_call_operand.hbm [shape: bf16[128,128], index: 2, kind: input, shape index: {}]
  %s3 = inlined_call_operand.hbm [shape: bf16[128,128], index: 3, kind: input, shape index: {}]
  %s4 = inlined_call_operand.hbm [shape: bf16[128,128], index: 4, kind: input, shape index: {}]
  %s5 = inlined_call_operand.vmem [shape: f32[2,128], index: 5, kind: input, shape index: {}]
  %s6 = inlined_call_operand.vmem [shape: f32[2,128], index: 6, kind: input, shape index: {}]
  %s7 = inlined_call_operand.hbm [shape: bf16[8,128], index: 7, kind: output, shape index: {}]
  %s8 = sld [smem:[#allocation0]]
  $region58: #{tpu_custom_call.1} parent=0
    _
  %s10 = ssub.s32 1, %s8
  %s11 = scalar_select 0, %s10, %s8
  $region1: #{tpu_custom_call.1} parent=0
    #allocation2 [shape = 'u8[2048]{0}', space=vmem, size = 0x800, scoped, tag = 'input window, operand 0, single buffered']
    #allocation3 [shape = 's32[1]{0}', space=sflag, size = 0x4, scoped, tag = 'scoped memory for tpu_custom_call.1']
    #allocation4 [shape = 's32[1]{0}', space=sflag, size = 0x4, scoped, tag = 'scoped memory for tpu_custom_call.1']
    #allocation5 [shape = 'u8[32768]{0}', space=vmem, size = 0x8000, scoped, tag = 'input window, operand 1, single buffered']
    #allocation6 [shape = 's32[1]{0}', space=sflag, size = 0x4, scoped, tag = 'scoped memory for tpu_custom_call.1']
    #allocation7 [shape = 'u8[32768]{0}', space=vmem, size = 0x8000, scoped, tag = 'input window, operand 2, single buffered']
    #allocation8 [shape = 'u8[32768]{0}', space=vmem, size = 0x8000, scoped, tag = 'input window, operand 3, single buffered']
    #allocation9 [shape = 's32[1]{0}', space=sflag, size = 0x4, scoped, tag = 'scoped memory for tpu_custom_call.1']
    #allocation10 [shape = 'u8[32768]{0}', space=vmem, size = 0x8000, scoped, tag = 'input window, operand 4, single buffered']
    #allocation11 [shape = 'u8[2048]{0}', space=vmem, size = 0x800, scoped, tag = 'output window, operand 0, single buffered']
    %12 = vsyncpa [#allocation3], 0
    %13 = vsyncpa [#allocation6], 0
    %14 = vsyncpa [#allocation9], 0
    %15 = vsyncpa [#allocation4], 0
    // Predicated region
    $region2: #{tpu_custom_call.1} parent=1 // pred_check
      _
    $region3: #{tpu_custom_call.1} parent=1 // pred_check_branch
      %17 = sbr.rel (0) target = $region5
    $region4: #{tpu_custom_call.1} parent=1 // pred_region
      %s19 = ssub.s32 64, 64
      %20 = vsyncadd [#allocation3], %s19
      %s22 = sshll.u32 [#allocation2], 4
      %s23 = int_to_ptr.vmem [resolvable:$true] %s22
      %25 = dma.hbm_to_vmem [thread:$0]  %s0, 64, %s23, [#allocation3]
    $region5: #{tpu_custom_call.1} parent=1 // pred_fallthru
      _
    // Predicated region
    $region6: #{tpu_custom_call.1} parent=1 // pred_check
      _
    $region7: #{tpu_custom_call.1} parent=1 // pred_check_branch
      %27 = sbr.rel (0) target = $region9
    $region8: #{tpu_custom_call.1} parent=1 // pred_region
      %s29 = ssub.s32 1024, 1024
      %30 = vsyncadd [#allocation6], %s29
      %s31 = sshll.u32 [#allocation5], 4
      %s32 = int_to_ptr.vmem [resolvable:$true] %s31
      %37 = dma.hbm_to_vmem [thread:$0]  %s1, 1024, %s32, [#allocation6], 64, 64, 4
    $region9: #{tpu_custom_call.1} parent=1 // pred_fallthru
      _
    // Predicated region
    $region10: #{tpu_custom_call.1} parent=1 // pred_check
      _
    $region11: #{tpu_custom_call.1} parent=1 // pred_check_branch
      %39 = sbr.rel (0) target = $region13
    $region12: #{tpu_custom_call.1} parent=1 // pred_region
      %s41 = ssub.s32 1024, 1024
      %42 = vsyncadd [#allocation6], %s41
      %s43 = sshll.u32 [#allocation7], 4
      %s44 = int_to_ptr.vmem [resolvable:$true] %s43
      %49 = dma.hbm_to_vmem [thread:$0]  %s2, 1024, %s44, [#allocation6], 64, 64, 4
    $region13: #{tpu_custom_call.1} parent=1 // pred_fallthru
      _
    // Predicated region
    $region14: #{tpu_custom_call.1} parent=1 // pred_check
      _
    $region15: #{tpu_custom_call.1} parent=1 // pred_check_branch
      %51 = sbr.rel (0) target = $region17
    $region16: #{tpu_custom_call.1} parent=1 // pred_region
      %s53 = ssub.s32 1024, 1024
      %54 = vsyncadd [#allocation9], %s53
      %s55 = sshll.u32 [#allocation8], 4
      %s56 = int_to_ptr.vmem [resolvable:$true] %s55
      %61 = dma.hbm_to_vmem [thread:$0]  %s3, 1024, %s56, [#allocation9], 64, 64, 4
    $region17: #{tpu_custom_call.1} parent=1 // pred_fallthru
      _
    // Predicated region
    $region18: #{tpu_custom_call.1} parent=1 // pred_check
      _
    $region19: #{tpu_custom_call.1} parent=1 // pred_check_branch
      %63 = sbr.rel (0) target = $region21
    $region20: #{tpu_custom_call.1} parent=1 // pred_region
      %s65 = ssub.s32 1024, 1024
      %66 = vsyncadd [#allocation9], %s65
      %s67 = sshll.u32 [#allocation10], 4
      %s68 = int_to_ptr.vmem [resolvable:$true] %s67
      %73 = dma.hbm_to_vmem [thread:$0]  %s4, 1024, %s68, [#allocation9], 64, 64, 4
    $region21: #{tpu_custom_call.1} parent=1 // pred_fallthru
      _
    // Predicated region
    $region22: #{tpu_custom_call.1} parent=1 // pred_check
      _
    $region23: #{tpu_custom_call.1} parent=1 // pred_check_branch
      %75 = sbr.rel (0) target = $region25
    $region24: #{tpu_custom_call.1} parent=1 // pred_region
      _
    $region25: #{tpu_custom_call.1} parent=1 // pred_fallthru
      _
    // Predicated region
    $region26: #{tpu_custom_call.1} parent=1 // pred_check
      _
    $region27: #{tpu_custom_call.1} parent=1 // pred_check_branch
      %77 = sbr.rel (0) target = $region29
    $region28: #{tpu_custom_call.1} parent=1 // pred_region
      _
    $region29: #{tpu_custom_call.1} parent=1 // pred_fallthru
      _
    // Predicated region
    $region30: #{tpu_custom_call.1} parent=1 // pred_check
      _
    $region31: #{tpu_custom_call.1} parent=1 // pred_check_branch
      %79 = sbr.rel (0) target = $region33
    $region32: #{tpu_custom_call.1} parent=1 // pred_region
      %80 = dma.done [#allocation3], 64
    $region33: #{tpu_custom_call.1} parent=1 // pred_fallthru
      _
    // Predicated region
    $region34: #{tpu_custom_call.1} parent=1 // pred_check
      _
    $region35: #{tpu_custom_call.1} parent=1 // pred_check_branch
      %82 = sbr.rel (0) target = $region37
    $region36: #{tpu_custom_call.1} parent=1 // pred_region
      %83 = dma.done [#allocation6], 1024
    $region37: #{tpu_custom_call.1} parent=1 // pred_fallthru
      _
    // Predicated region
    $region38: #{tpu_custom_call.1} parent=1 // pred_check
      _
    $region39: #{tpu_custom_call.1} parent=1 // pred_check_branch
      %85 = sbr.rel (0) target = $region41
    $region40: #{tpu_custom_call.1} parent=1 // pred_region
      %86 = dma.done [#allocation6], 1024
    $region41: #{tpu_custom_call.1} parent=1 // pred_fallthru
      _
    // Predicated region
    $region42: #{tpu_custom_call.1} parent=1 // pred_check
      _
    $region43: #{tpu_custom_call.1} parent=1 // pred_check_branch
      %88 = sbr.rel (0) target = $region45
    $region44: #{tpu_custom_call.1} parent=1 // pred_region
      %89 = dma.done [#allocation9], 1024
    $region45: #{tpu_custom_call.1} parent=1 // pred_fallthru
      _
    // Predicated region
    $region46: #{tpu_custom_call.1} parent=1 // pred_check
      _
    $region47: #{tpu_custom_call.1} parent=1 // pred_check_branch
      %91 = sbr.rel (0) target = $region49
    $region48: #{tpu_custom_call.1} parent=1 // pred_region
      %92 = dma.done [#allocation9], 1024
    $region49: #{tpu_custom_call.1} parent=1 // pred_fallthru
      _
    %v94 = vld [vmem:[#allocation2] sm:$0xf]
    %v95 = vld [vmem:[#allocation5] sm:$0xf]
    %v96 = vld [vmem:[#allocation5 + $0x4] sm:$0xf]
    %v97 = vld [vmem:[#allocation5 + $0x8] sm:$0xf]
    %v98 = vld [vmem:[#allocation5 + $0xc] sm:$0xf]
    %v99 = vld [vmem:[#allocation5 + $0x10] sm:$0xf]
    %v100 = vld [vmem:[#allocation5 + $0x14] sm:$0xf]
    %v101 = vld [vmem:[#allocation5 + $0x18] sm:$0xf]
    %v102 = vld [vmem:[#allocation5 + $0x1c] sm:$0xf]
    %v103 = vld [vmem:[#allocation5 + $0x20] sm:$0xf]
    %v104 = vld [vmem:[#allocation5 + $0x24] sm:$0xf]
    %v105 = vld [vmem:[#allocation5 + $0x28] sm:$0xf]
    %v106 = vld [vmem:[#allocation5 + $0x2c] sm:$0xf]
    %v107 = vld [vmem:[#allocation5 + $0x30] sm:$0xf]
    %v108 = vld [vmem:[#allocation5 + $0x34] sm:$0xf]
    %v109 = vld [vmem:[#allocation5 + $0x38] sm:$0xf]
    %v110 = vld [vmem:[#allocation5 + $0x3c] sm:$0xf]
    %v111 = vld [vmem:[%s5] sm:$0x1]
    %v112 = vlaneseq
    %v113 = vshrl.u32 %v112, 7
    %v114 = vsub.s32 0, %v113
    %v115 = vrot.slane %v111, %v114
    %v132 = vunpack.c.l.b16 %v95
    %v133 = vunpack.c.l.b16 %v96
    %v134 = vunpack.c.l.b16 %v97
    %v135 = vunpack.c.l.b16 %v98
    %v136 = vunpack.c.l.b16 %v99
    %v137 = vunpack.c.l.b16 %v100
    %v138 = vunpack.c.l.b16 %v101
    %v139 = vunpack.c.l.b16 %v102
    %v140 = vunpack.c.l.b16 %v103
    %v141 = vunpack.c.l.b16 %v104
    %v142 = vunpack.c.l.b16 %v105
    %v143 = vunpack.c.l.b16 %v106
    %v144 = vunpack.c.l.b16 %v107
    %v145 = vunpack.c.l.b16 %v108
    %v146 = vunpack.c.l.b16 %v109
    %v147 = vunpack.c.l.b16 %v110
    %v148 = vpack.c.b16 %v133, %v132
    %v149 = vpack.c.b16 %v135, %v134
    %v150 = vpack.c.b16 %v137, %v136
    %v151 = vpack.c.b16 %v139, %v138
    %v152 = vpack.c.b16 %v141, %v140
    %v153 = vpack.c.b16 %v143, %v142
    %v154 = vpack.c.b16 %v145, %v144
    %v155 = vpack.c.b16 %v147, %v146
    %164 = vmatprep.subr.bf16.mxu0 0
    %165 = vmatpush1.bf16.msra.mxu0 %v148
    %166 = vmatprep.subr.bf16.mxu0 0
    %167 = vmatpush1.bf16.msra.mxu0 %v149
    %168 = vmatprep.subr.bf16.mxu0 0
    %169 = vmatpush1.bf16.msra.mxu0 %v150
    %170 = vmatprep.subr.bf16.mxu0 0
    %171 = vmatpush1.bf16.msra.mxu0 %v151
    %172 = vmatprep.subr.bf16.mxu0 0
    %173 = vmatpush1.bf16.msra.mxu0 %v152
    %174 = vmatprep.subr.bf16.mxu0 0
    %175 = vmatpush1.bf16.msra.mxu0 %v153
    %176 = vmatprep.subr.bf16.mxu0 0
    %177 = vmatpush1.bf16.msra.mxu0 %v154
    %178 = vmatprep.subr.bf16.mxu0 0
    %179 = vmatpush1.bf16.msra.mxu0 %v155
    %180 = vmatprep.subr.bf16.mxu0 0
    %181 = vmatpush1.bf16.msra.mxu0 0
    %182 = vmatprep.subr.bf16.mxu0 0
    %183 = vmatpush1.bf16.msra.mxu0 0
    %184 = vmatprep.subr.bf16.mxu0 0
    %185 = vmatpush1.bf16.msra.mxu0 0
    %186 = vmatprep.subr.bf16.mxu0 0
    %187 = vmatpush1.bf16.msra.mxu0 0
    %188 = vmatprep.subr.bf16.mxu0 0
    %189 = vmatpush1.bf16.msra.mxu0 0
    %190 = vmatprep.subr.bf16.mxu0 0
    %191 = vmatpush1.bf16.msra.mxu0 0
    %192 = vmatprep.subr.bf16.mxu0 0
    %193 = vmatpush1.bf16.msra.mxu0 0
    %194 = vmatprep.subr.bf16.mxu0 0
    %195 = vmatpush1.bf16.msra.mxu0 0
    %196 = vmatprep.mubr.bf16.mxu0 0
    %197 = vmatmul.mubr.bf16.gmra.mrb[0].mxu0 %v94
    %v198 = vpop.f32.mrb[0].mxu0
    %v199 = vadd.f32 %v115, %v198
    %v200 = vpop.f32.mrb[0].mxu0
    %v201 = vpop.f32.mrb[0].mxu0
    %v202 = vpop.f32.mrb[0].mxu0
    %203 = vdwg.mxu0
    %v204 = vmul.f32 %v199, 0.5
    %v205 = vtanh.pop %v204
    %v206 = vmul.f32 %v205, 0.5
    %v207 = vadd.f32 %v206, 0.5
    %v208 = vpack.c.bf16 %v207, %v207
    %v209 = vld [vmem:[#allocation7] sm:$0xf]
    %v210 = vld [vmem:[#allocation7 + $0x4] sm:$0xf]
    %v211 = vld [vmem:[#allocation7 + $0x8] sm:$0xf]
    %v212 = vld [vmem:[#allocation7 + $0xc] sm:$0xf]
    %v213 = vld [vmem:[#allocation7 + $0x10] sm:$0xf]
    %v214 = vld [vmem:[#allocation7 + $0x14] sm:$0xf]
    %v215 = vld [vmem:[#allocation7 + $0x18] sm:$0xf]
    %v216 = vld [vmem:[#allocation7 + $0x1c] sm:$0xf]
    %v217 = vld [vmem:[#allocation7 + $0x20] sm:$0xf]
    %v218 = vld [vmem:[#allocation7 + $0x24] sm:$0xf]
    %v219 = vld [vmem:[#allocation7 + $0x28] sm:$0xf]
    %v220 = vld [vmem:[#allocation7 + $0x2c] sm:$0xf]
    %v221 = vld [vmem:[#allocation7 + $0x30] sm:$0xf]
    %v222 = vld [vmem:[#allocation7 + $0x34] sm:$0xf]
    %v223 = vld [vmem:[#allocation7 + $0x38] sm:$0xf]
    %v224 = vld [vmem:[#allocation7 + $0x3c] sm:$0xf]
    %v225 = vld [vmem:[%s5 + $0x1] sm:$0x1]
    %v226 = vlaneseq
    %v227 = vshrl.u32 %v226, 7
    %v228 = vsub.s32 0, %v227
    %v229 = vrot.slane %v225, %v228
    %v246 = vunpack.c.l.b16 %v209
    %v247 = vunpack.c.l.b16 %v210
    %v248 = vunpack.c.l.b16 %v211
    %v249 = vunpack.c.l.b16 %v212
    %v250 = vunpack.c.l.b16 %v213
    %v251 = vunpack.c.l.b16 %v214
    %v252 = vunpack.c.l.b16 %v215
    %v253 = vunpack.c.l.b16 %v216
    %v254 = vunpack.c.l.b16 %v217
    %v255 = vunpack.c.l.b16 %v218
    %v256 = vunpack.c.l.b16 %v219
    %v257 = vunpack.c.l.b16 %v220
    %v258 = vunpack.c.l.b16 %v221
    %v259 = vunpack.c.l.b16 %v222
    %v260 = vunpack.c.l.b16 %v223
    %v261 = vunpack.c.l.b16 %v224
    %v262 = vpack.c.b16 %v247, %v246
    %v263 = vpack.c.b16 %v249, %v248
    %v264 = vpack.c.b16 %v251, %v250
    %v265 = vpack.c.b16 %v253, %v252
    %v266 = vpack.c.b16 %v255, %v254
    %v267 = vpack.c.b16 %v257, %v256
    %v268 = vpack.c.b16 %v259, %v258
    %v269 = vpack.c.b16 %v261, %v260
    %278 = vmatprep.subr.bf16.mxu0 0
    %279 = vmatpush1.bf16.msra.mxu0 %v262
    %280 = vmatprep.subr.bf16.mxu0 0
    %281 = vmatpush1.bf16.msra.mxu0 %v263
    %282 = vmatprep.subr.bf16.mxu0 0
    %283 = vmatpush1.bf16.msra.mxu0 %v264
    %284 = vmatprep.subr.bf16.mxu0 0
    %285 = vmatpush1.bf16.msra.mxu0 %v265
    %286 = vmatprep.subr.bf16.mxu0 0
    %287 = vmatpush1.bf16.msra.mxu0 %v266
    %288 = vmatprep.subr.bf16.mxu0 0
    %289 = vmatpush1.bf16.msra.mxu0 %v267
    %290 = vmatprep.subr.bf16.mxu0 0
    %291 = vmatpush1.bf16.msra.mxu0 %v268
    %292 = vmatprep.subr.bf16.mxu0 0
    %293 = vmatpush1.bf16.msra.mxu0 %v269
    %294 = vmatprep.subr.bf16.mxu0 0
    %295 = vmatpush1.bf16.msra.mxu0 0
    %296 = vmatprep.subr.bf16.mxu0 0
    %297 = vmatpush1.bf16.msra.mxu0 0
    %298 = vmatprep.subr.bf16.mxu0 0
    %299 = vmatpush1.bf16.msra.mxu0 0
    %300 = vmatprep.subr.bf16.mxu0 0
    %301 = vmatpush1.bf16.msra.mxu0 0
    %302 = vmatprep.subr.bf16.mxu0 0
    %303 = vmatpush1.bf16.msra.mxu0 0
    %304 = vmatprep.subr.bf16.mxu0 0
    %305 = vmatpush1.bf16.msra.mxu0 0
    %306 = vmatprep.subr.bf16.mxu0 0
    %307 = vmatpush1.bf16.msra.mxu0 0
    %308 = vmatprep.subr.bf16.mxu0 0
    %309 = vmatpush1.bf16.msra.mxu0 0
    %310 = vmatprep.mubr.bf16.mxu0 0
    %311 = vmatmul.mubr.bf16.gmra.mrb[0].mxu0 %v208
    %v312 = vpop.f32.mrb[0].mxu0
    %v313 = vadd.f32 %v229, %v312
    %v314 = vpop.f32.mrb[0].mxu0
    %v315 = vpop.f32.mrb[0].mxu0
    %v316 = vpop.f32.mrb[0].mxu0
    %317 = vdwg.mxu0
    %v318 = vpack.c.bf16 %v313, %v313
    %v319 = vld [vmem:[#allocation10] sm:$0xf]
    %v320 = vld [vmem:[#allocation10 + $0x4] sm:$0xf]
    %v321 = vld [vmem:[#allocation10 + $0x8] sm:$0xf]
    %v322 = vld [vmem:[#allocation10 + $0xc] sm:$0xf]
    %v323 = vld [vmem:[#allocation10 + $0x10] sm:$0xf]
    %v324 = vld [vmem:[#allocation10 + $0x14] sm:$0xf]
    %v325 = vld [vmem:[#allocation10 + $0x18] sm:$0xf]
    %v326 = vld [vmem:[#allocation10 + $0x1c] sm:$0xf]
    %v327 = vld [vmem:[#allocation10 + $0x20] sm:$0xf]
    %v328 = vld [vmem:[#allocation10 + $0x24] sm:$0xf]
    %v329 = vld [vmem:[#allocation10 + $0x28] sm:$0xf]
    %v330 = vld [vmem:[#allocation10 + $0x2c] sm:$0xf]
    %v331 = vld [vmem:[#allocation10 + $0x30] sm:$0xf]
    %v332 = vld [vmem:[#allocation10 + $0x34] sm:$0xf]
    %v333 = vld [vmem:[#allocation10 + $0x38] sm:$0xf]
    %v334 = vld [vmem:[#allocation10 + $0x3c] sm:$0xf]
    %v335 = vld [vmem:[%s6 + $0x1] sm:$0x1]
    %v336 = vlaneseq
    %v337 = vshrl.u32 %v336, 7
    %v338 = vsub.s32 0, %v337
    %v339 = vrot.slane %v335, %v338
    %v356 = vunpack.c.l.b16 %v319
    %v357 = vunpack.c.l.b16 %v320
    %v358 = vunpack.c.l.b16 %v321
    %v359 = vunpack.c.l.b16 %v322
    %v360 = vunpack.c.l.b16 %v323
    %v361 = vunpack.c.l.b16 %v324
    %v362 = vunpack.c.l.b16 %v325
    %v363 = vunpack.c.l.b16 %v326
    %v364 = vunpack.c.l.b16 %v327
    %v365 = vunpack.c.l.b16 %v328
    %v366 = vunpack.c.l.b16 %v329
    %v367 = vunpack.c.l.b16 %v330
    %v368 = vunpack.c.l.b16 %v331
    %v369 = vunpack.c.l.b16 %v332
    %v370 = vunpack.c.l.b16 %v333
    %v371 = vunpack.c.l.b16 %v334
    %v372 = vpack.c.b16 %v357, %v356
    %v373 = vpack.c.b16 %v359, %v358
    %v374 = vpack.c.b16 %v361, %v360
    %v375 = vpack.c.b16 %v363, %v362
    %v376 = vpack.c.b16 %v365, %v364
    %v377 = vpack.c.b16 %v367, %v366
    %v378 = vpack.c.b16 %v369, %v368
    %v379 = vpack.c.b16 %v371, %v370
    %388 = vmatprep.subr.bf16.mxu0 0
    %389 = vmatpush1.bf16.msra.mxu0 %v372
    %390 = vmatprep.subr.bf16.mxu0 0
    %391 = vmatpush1.bf16.msra.mxu0 %v373
    %392 = vmatprep.subr.bf16.mxu0 0
    %393 = vmatpush1.bf16.msra.mxu0 %v374
    %394 = vmatprep.subr.bf16.mxu0 0
    %395 = vmatpush1.bf16.msra.mxu0 %v375
    %396 = vmatprep.subr.bf16.mxu0 0
    %397 = vmatpush1.bf16.msra.mxu0 %v376
    %398 = vmatprep.subr.bf16.mxu0 0
    %399 = vmatpush1.bf16.msra.mxu0 %v377
    %400 = vmatprep.subr.bf16.mxu0 0
    %401 = vmatpush1.bf16.msra.mxu0 %v378
    %402 = vmatprep.subr.bf16.mxu0 0
    %403 = vmatpush1.bf16.msra.mxu0 %v379
    %404 = vmatprep.subr.bf16.mxu0 0
    %405 = vmatpush1.bf16.msra.mxu0 0
    %406 = vmatprep.subr.bf16.mxu0 0
    %407 = vmatpush1.bf16.msra.mxu0 0
    %408 = vmatprep.subr.bf16.mxu0 0
    %409 = vmatpush1.bf16.msra.mxu0 0
    %410 = vmatprep.subr.bf16.mxu0 0
    %411 = vmatpush1.bf16.msra.mxu0 0
    %412 = vmatprep.subr.bf16.mxu0 0
    %413 = vmatpush1.bf16.msra.mxu0 0
    %414 = vmatprep.subr.bf16.mxu0 0
    %415 = vmatpush1.bf16.msra.mxu0 0
    %416 = vmatprep.subr.bf16.mxu0 0
    %417 = vmatpush1.bf16.msra.mxu0 0
    %418 = vmatprep.subr.bf16.mxu0 0
    %419 = vmatpush1.bf16.msra.mxu0 0
    %420 = vmatprep.mubr.bf16.mxu0 0
    %421 = vmatmul.mubr.bf16.gmra.mrb[0].mxu0 %v318
    %v422 = vpop.f32.mrb[0].mxu0
    %v423 = vadd.f32 %v339, %v422
    %v424 = vpop.f32.mrb[0].mxu0
    %v425 = vpop.f32.mrb[0].mxu0
    %v426 = vpop.f32.mrb[0].mxu0
    %427 = vdwg.mxu0
    %v428 = vmul.f32 %v423, 0.5
    %v429 = vtanh.pop %v428
    %v430 = vmul.f32 %v429, 0.5
    %v431 = vadd.f32 %v430, 0.5
    %v432 = vpack.c.bf16 %v431, %v431
    %v433 = vld [vmem:[#allocation8] sm:$0xf]
    %v434 = vld [vmem:[#allocation8 + $0x4] sm:$0xf]
    %v435 = vld [vmem:[#allocation8 + $0x8] sm:$0xf]
    %v436 = vld [vmem:[#allocation8 + $0xc] sm:$0xf]
    %v437 = vld [vmem:[#allocation8 + $0x10] sm:$0xf]
    %v438 = vld [vmem:[#allocation8 + $0x14] sm:$0xf]
    %v439 = vld [vmem:[#allocation8 + $0x18] sm:$0xf]
    %v440 = vld [vmem:[#allocation8 + $0x1c] sm:$0xf]
    %v441 = vld [vmem:[#allocation8 + $0x20] sm:$0xf]
    %v442 = vld [vmem:[#allocation8 + $0x24] sm:$0xf]
    %v443 = vld [vmem:[#allocation8 + $0x28] sm:$0xf]
    %v444 = vld [vmem:[#allocation8 + $0x2c] sm:$0xf]
    %v445 = vld [vmem:[#allocation8 + $0x30] sm:$0xf]
    %v446 = vld [vmem:[#allocation8 + $0x34] sm:$0xf]
    %v447 = vld [vmem:[#allocation8 + $0x38] sm:$0xf]
    %v448 = vld [vmem:[#allocation8 + $0x3c] sm:$0xf]
    %v449 = vld [vmem:[%s6] sm:$0x1]
    %v450 = vlaneseq
    %v451 = vshrl.u32 %v450, 7
    %v452 = vsub.s32 0, %v451
    %v453 = vrot.slane %v449, %v452
    %v470 = vunpack.c.l.b16 %v433
    %v471 = vunpack.c.l.b16 %v434
    %v472 = vunpack.c.l.b16 %v435
    %v473 = vunpack.c.l.b16 %v436
    %v474 = vunpack.c.l.b16 %v437
    %v475 = vunpack.c.l.b16 %v438
    %v476 = vunpack.c.l.b16 %v439
    %v477 = vunpack.c.l.b16 %v440
    %v478 = vunpack.c.l.b16 %v441
    %v479 = vunpack.c.l.b16 %v442
    %v480 = vunpack.c.l.b16 %v443
    %v481 = vunpack.c.l.b16 %v444
    %v482 = vunpack.c.l.b16 %v445
    %v483 = vunpack.c.l.b16 %v446
    %v484 = vunpack.c.l.b16 %v447
    %v485 = vunpack.c.l.b16 %v448
    %v486 = vpack.c.b16 %v471, %v470
    %v487 = vpack.c.b16 %v473, %v472
    %v488 = vpack.c.b16 %v475, %v474
    %v489 = vpack.c.b16 %v477, %v476
    %v490 = vpack.c.b16 %v479, %v478
    %v491 = vpack.c.b16 %v481, %v480
    %v492 = vpack.c.b16 %v483, %v482
    %v493 = vpack.c.b16 %v485, %v484
    %502 = vmatprep.subr.bf16.mxu0 0
    %503 = vmatpush1.bf16.msra.mxu0 %v486
    %504 = vmatprep.subr.bf16.mxu0 0
    %505 = vmatpush1.bf16.msra.mxu0 %v487
    %506 = vmatprep.subr.bf16.mxu0 0
    %507 = vmatpush1.bf16.msra.mxu0 %v488
    %508 = vmatprep.subr.bf16.mxu0 0
    %509 = vmatpush1.bf16.msra.mxu0 %v489
    %510 = vmatprep.subr.bf16.mxu0 0
    %511 = vmatpush1.bf16.msra.mxu0 %v490
    %512 = vmatprep.subr.bf16.mxu0 0
    %513 = vmatpush1.bf16.msra.mxu0 %v491
    %514 = vmatprep.subr.bf16.mxu0 0
    %515 = vmatpush1.bf16.msra.mxu0 %v492
    %516 = vmatprep.subr.bf16.mxu0 0
    %517 = vmatpush1.bf16.msra.mxu0 %v493
    %518 = vmatprep.subr.bf16.mxu0 0
    %519 = vmatpush1.bf16.msra.mxu0 0
    %520 = vmatprep.subr.bf16.mxu0 0
    %521 = vmatpush1.bf16.msra.mxu0 0
    %522 = vmatprep.subr.bf16.mxu0 0
    %523 = vmatpush1.bf16.msra.mxu0 0
    %524 = vmatprep.subr.bf16.mxu0 0
    %525 = vmatpush1.bf16.msra.mxu0 0
    %526 = vmatprep.subr.bf16.mxu0 0
    %527 = vmatpush1.bf16.msra.mxu0 0
    %528 = vmatprep.subr.bf16.mxu0 0
    %529 = vmatpush1.bf16.msra.mxu0 0
    %530 = vmatprep.subr.bf16.mxu0 0
    %531 = vmatpush1.bf16.msra.mxu0 0
    %532 = vmatprep.subr.bf16.mxu0 0
    %533 = vmatpush1.bf16.msra.mxu0 0
    %534 = vmatprep.mubr.bf16.mxu0 0
    %535 = vmatmul.mubr.bf16.gmra.mrb[0].mxu0 %v432
    %v536 = vpop.f32.mrb[0].mxu0
    %v537 = vadd.f32 %v453, %v536
    %v538 = vpop.f32.mrb[0].mxu0
    %v539 = vpop.f32.mrb[0].mxu0
    %v540 = vpop.f32.mrb[0].mxu0
    %541 = vdwg.mxu0
    %v542 = vmul.f32 %v537, 0.5
    %v543 = vtanh.pop %v542
    %v544 = vmul.f32 %v543, 0.5
    %v545 = vadd.f32 %v544, 0.5
    %v546 = vpack.c.bf16 %v545, %v545
    %547 = vst [vmem:[#allocation11] sm:$0xf] %v546
    // Predicated region
    $region50: #{tpu_custom_call.1} parent=1 // pred_check
      _
    $region51: #{tpu_custom_call.1} parent=1 // pred_check_branch
      %549 = sbr.rel (0) target = $region53
    $region52: #{tpu_custom_call.1} parent=1 // pred_region
      %s551 = ssub.s32 64, 64
      %552 = vsyncadd [#allocation4], %s551
      %s554 = sshll.u32 [#allocation11], 4
      %s555 = int_to_ptr.vmem [resolvable:$true] %s554
      %557 = dma.vmem_to_hbm [thread:$0]  %s555, 64, %s7, [#allocation4]
    $region53: #{tpu_custom_call.1} parent=1 // pred_fallthru
      _
    // Predicated region
    $region54: #{tpu_custom_call.1} parent=1 // pred_check
      _
    $region55: #{tpu_custom_call.1} parent=1 // pred_check_branch
      %559 = sbr.rel (0) target = $region57
    $region56: #{tpu_custom_call.1} parent=1 // pred_region
      %560 = dma.done [#allocation4], 64
    $region57: #{tpu_custom_call.1} parent=1 // pred_fallthru
      _
    %561 = vsyncpa [#allocation3], 1
    %562 = vsyncpa [#allocation6], 1
    %563 = vsyncpa [#allocation9], 1
    %564 = vsyncpa [#allocation4], 1

// kernel: tpu_custom_call.1
$region0: #{tpu_custom_call.1}
  #allocation0 [shape = 'u32[]', space=smem, size = 0x4, offset = 0x4, fixed_abs, tag = 'smem constant byte address 0x4 - core index']
  #allocation1 [shape = 'u32[144,128]{1,0:T(1,128)}', space=vmem, size = 0x12000, scoped, tag = 'internal scratch']
  %s0 = inlined_call_operand.hbm [shape: bf16[8,128], index: 0, kind: input, shape index: {}]
  %s1 = inlined_call_operand.hbm [shape: bf16[128,128], index: 1, kind: input, shape index: {}]
  %s2 = inlined_call_operand.hbm [shape: bf16[128,128], index: 2, kind: input, shape index: {}]
  %s3 = inlined_call_operand.hbm [shape: bf16[128,128], index: 3, kind: input, shape index: {}]
  %s4 = inlined_call_operand.hbm [shape: bf16[128,128], index: 4, kind: input, shape index: {}]
  %s5 = inlined_call_operand.vmem [shape: f32[2,128], index: 5, kind: input, shape index: {}]
  %s6 = inlined_call_operand.vmem [shape: f32[2,128], index: 6, kind: input, shape index: {}]
  %s7 = inlined_call_operand.hbm [shape: bf16[8,128], index: 7, kind: output, shape index: {}]
  %s8 = sld [smem:[#allocation0]]
  $region58: #{tpu_custom_call.1} parent=0
    _
  %s10 = ssub.s32 1, %s8
  %s11 = scalar_select 0, %s10, %s8
  $region1: #{tpu_custom_call.1} parent=0
    #allocation2 [shape = 'u8[2048]{0}', space=vmem, size = 0x800, scoped, tag = 'input window, operand 0, single buffered']
    #allocation3 [shape = 's32[1]{0}', space=sflag, size = 0x4, scoped, tag = 'scoped memory for tpu_custom_call.1']
    #allocation4 [shape = 's32[1]{0}', space=sflag, size = 0x4, scoped, tag = 'scoped memory for tpu_custom_call.1']
    #allocation5 [shape = 'u8[32768]{0}', space=vmem, size = 0x8000, scoped, tag = 'input window, operand 1, single buffered']
    #allocation6 [shape = 's32[1]{0}', space=sflag, size = 0x4, scoped, tag = 'scoped memory for tpu_custom_call.1']
    #allocation7 [shape = 'u8[32768]{0}', space=vmem, size = 0x8000, scoped, tag = 'input window, operand 2, single buffered']
    #allocation8 [shape = 'u8[32768]{0}', space=vmem, size = 0x8000, scoped, tag = 'input window, operand 3, single buffered']
    #allocation9 [shape = 's32[1]{0}', space=sflag, size = 0x4, scoped, tag = 'scoped memory for tpu_custom_call.1']
    #allocation10 [shape = 'u8[32768]{0}', space=vmem, size = 0x8000, scoped, tag = 'input window, operand 4, single buffered']
    #allocation11 [shape = 'u8[2048]{0}', space=vmem, size = 0x800, scoped, tag = 'output window, operand 0, single buffered']
    %12 = vsyncpa [#allocation3], 0
    %13 = vsyncpa [#allocation6], 0
    %14 = vsyncpa [#allocation9], 0
    %15 = vsyncpa [#allocation4], 0
    // Predicated region
    $region2: #{tpu_custom_call.1} parent=1 // pred_check
      _
    $region3: #{tpu_custom_call.1} parent=1 // pred_check_branch
      %17 = sbr.rel (0) target = $region5
    $region4: #{tpu_custom_call.1} parent=1 // pred_region
      %s19 = ssub.s32 64, 64
      %20 = vsyncadd [#allocation3], %s19
      %s22 = sshll.u32 [#allocation2], 4
      %s23 = int_to_ptr.vmem [resolvable:$true] %s22
      %25 = dma.hbm_to_vmem [thread:$0]  %s0, 64, %s23, [#allocation3]
    $region5: #{tpu_custom_call.1} parent=1 // pred_fallthru
      _
    // Predicated region
    $region6: #{tpu_custom_call.1} parent=1 // pred_check
      _
    $region7: #{tpu_custom_call.1} parent=1 // pred_check_branch
      %27 = sbr.rel (0) target = $region9
    $region8: #{tpu_custom_call.1} parent=1 // pred_region
      %s29 = ssub.s32 1024, 1024
      %30 = vsyncadd [#allocation6], %s29
      %s31 = sshll.u32 [#allocation5], 4
      %s32 = int_to_ptr.vmem [resolvable:$true] %s31
      %37 = dma.hbm_to_vmem [thread:$0]  %s1, 1024, %s32, [#allocation6], 64, 64, 4
    $region9: #{tpu_custom_call.1} parent=1 // pred_fallthru
      _
    // Predicated region
    $region10: #{tpu_custom_call.1} parent=1 // pred_check
      _
    $region11: #{tpu_custom_call.1} parent=1 // pred_check_branch
      %39 = sbr.rel (0) target = $region13
    $region12: #{tpu_custom_call.1} parent=1 // pred_region
      %s41 = ssub.s32 1024, 1024
      %42 = vsyncadd [#allocation6], %s41
      %s43 = sshll.u32 [#allocation7], 4
      %s44 = int_to_ptr.vmem [resolvable:$true] %s43
      %49 = dma.hbm_to_vmem [thread:$0]  %s2, 1024, %s44, [#allocation6], 64, 64, 4
    $region13: #{tpu_custom_call.1} parent=1 // pred_fallthru
      _
    // Predicated region
    $region14: #{tpu_custom_call.1} parent=1 // pred_check
      _
    $region15: #{tpu_custom_call.1} parent=1 // pred_check_branch
      %51 = sbr.rel (0) target = $region17
    $region16: #{tpu_custom_call.1} parent=1 // pred_region
      %s53 = ssub.s32 1024, 1024
      %54 = vsyncadd [#allocation9], %s53
      %s55 = sshll.u32 [#allocation8], 4
      %s56 = int_to_ptr.vmem [resolvable:$true] %s55
      %61 = dma.hbm_to_vmem [thread:$0]  %s3, 1024, %s56, [#allocation9], 64, 64, 4
    $region17: #{tpu_custom_call.1} parent=1 // pred_fallthru
      _
    // Predicated region
    $region18: #{tpu_custom_call.1} parent=1 // pred_check
      _
    $region19: #{tpu_custom_call.1} parent=1 // pred_check_branch
      %63 = sbr.rel (0) target = $region21
    $region20: #{tpu_custom_call.1} parent=1 // pred_region
      %s65 = ssub.s32 1024, 1024
      %66 = vsyncadd [#allocation9], %s65
      %s67 = sshll.u32 [#allocation10], 4
      %s68 = int_to_ptr.vmem [resolvable:$true] %s67
      %73 = dma.hbm_to_vmem [thread:$0]  %s4, 1024, %s68, [#allocation9], 64, 64, 4
    $region21: #{tpu_custom_call.1} parent=1 // pred_fallthru
      _
    // Predicated region
    $region22: #{tpu_custom_call.1} parent=1 // pred_check
      _
    $region23: #{tpu_custom_call.1} parent=1 // pred_check_branch
      %75 = sbr.rel (0) target = $region25
    $region24: #{tpu_custom_call.1} parent=1 // pred_region
      _
    $region25: #{tpu_custom_call.1} parent=1 // pred_fallthru
      _
    // Predicated region
    $region26: #{tpu_custom_call.1} parent=1 // pred_check
      _
    $region27: #{tpu_custom_call.1} parent=1 // pred_check_branch
      %77 = sbr.rel (0) target = $region29
    $region28: #{tpu_custom_call.1} parent=1 // pred_region
      _
    $region29: #{tpu_custom_call.1} parent=1 // pred_fallthru
      _
    // Predicated region
    $region30: #{tpu_custom_call.1} parent=1 // pred_check
      _
    $region31: #{tpu_custom_call.1} parent=1 // pred_check_branch
      %79 = sbr.rel (0) target = $region33
    $region32: #{tpu_custom_call.1} parent=1 // pred_region
      %80 = dma.done [#allocation3], 64
    $region33: #{tpu_custom_call.1} parent=1 // pred_fallthru
      _
    // Predicated region
    $region34: #{tpu_custom_call.1} parent=1 // pred_check
      _
    $region35: #{tpu_custom_call.1} parent=1 // pred_check_branch
      %82 = sbr.rel (0) target = $region37
    $region36: #{tpu_custom_call.1} parent=1 // pred_region
      %83 = dma.done [#allocation6], 1024
    $region37: #{tpu_custom_call.1} parent=1 // pred_fallthru
      _
    // Predicated region
    $region38: #{tpu_custom_call.1} parent=1 // pred_check
      _
    $region39: #{tpu_custom_call.1} parent=1 // pred_check_branch
      %85 = sbr.rel (0) target = $region41
    $region40: #{tpu_custom_call.1} parent=1 // pred_region
      %86 = dma.done [#allocation6], 1024
    $region41: #{tpu_custom_call.1} parent=1 // pred_fallthru
      _
    // Predicated region
    $region42: #{tpu_custom_call.1} parent=1 // pred_check
      _
    $region43: #{tpu_custom_call.1} parent=1 // pred_check_branch
      %88 = sbr.rel (0) target = $region45
    $region44: #{tpu_custom_call.1} parent=1 // pred_region
      %89 = dma.done [#allocation9], 1024
    $region45: #{tpu_custom_call.1} parent=1 // pred_fallthru
      _
    // Predicated region
    $region46: #{tpu_custom_call.1} parent=1 // pred_check
      _
    $region47: #{tpu_custom_call.1} parent=1 // pred_check_branch
      %91 = sbr.rel (0) target = $region49
    $region48: #{tpu_custom_call.1} parent=1 // pred_region
      %92 = dma.done [#allocation9], 1024
    $region49: #{tpu_custom_call.1} parent=1 // pred_fallthru
      _
    %v94 = vld [vmem:[#allocation2] sm:$0xf]
    %v95 = vld [vmem:[#allocation5] sm:$0xf]
    %v96 = vld [vmem:[#allocation5 + $0x4] sm:$0xf]
    %v97 = vld [vmem:[#allocation5 + $0x8] sm:$0xf]
    %v98 = vld [vmem:[#allocation5 + $0xc] sm:$0xf]
    %v99 = vld [vmem:[#allocation5 + $0x10] sm:$0xf]
    %v100 = vld [vmem:[#allocation5 + $0x14] sm:$0xf]
    %v101 = vld [vmem:[#allocation5 + $0x18] sm:$0xf]
    %v102 = vld [vmem:[#allocation5 + $0x1c] sm:$0xf]
    %v103 = vld [vmem:[#allocation5 + $0x20] sm:$0xf]
    %v104 = vld [vmem:[#allocation5 + $0x24] sm:$0xf]
    %v105 = vld [vmem:[#allocation5 + $0x28] sm:$0xf]
    %v106 = vld [vmem:[#allocation5 + $0x2c] sm:$0xf]
    %v107 = vld [vmem:[#allocation5 + $0x30] sm:$0xf]
    %v108 = vld [vmem:[#allocation5 + $0x34] sm:$0xf]
    %v109 = vld [vmem:[#allocation5 + $0x38] sm:$0xf]
    %v110 = vld [vmem:[#allocation5 + $0x3c] sm:$0xf]
    %v111 = vld [vmem:[%s5] sm:$0x1]
    %v112 = vlaneseq
    %v113 = vshrl.u32 %v112, 7
    %v114 = vsub.s32 0, %v113
    %v115 = vrot.slane %v111, %v114
    %v132 = vunpack.c.l.b16 %v95
    %v133 = vunpack.c.l.b16 %v96
    %v134 = vunpack.c.l.b16 %v97
    %v135 = vunpack.c.l.b16 %v98
    %v136 = vunpack.c.l.b16 %v99
    %v137 = vunpack.c.l.b16 %v100
    %v138 = vunpack.c.l.b16 %v101
    %v139 = vunpack.c.l.b16 %v102
    %v140 = vunpack.c.l.b16 %v103
    %v141 = vunpack.c.l.b16 %v104
    %v142 = vunpack.c.l.b16 %v105
    %v143 = vunpack.c.l.b16 %v106
    %v144 = vunpack.c.l.b16 %v107
    %v145 = vunpack.c.l.b16 %v108
    %v146 = vunpack.c.l.b16 %v109
    %v147 = vunpack.c.l.b16 %v110
    %v148 = vpack.c.b16 %v133, %v132
    %v149 = vpack.c.b16 %v135, %v134
    %v150 = vpack.c.b16 %v137, %v136
    %v151 = vpack.c.b16 %v139, %v138
    %v152 = vpack.c.b16 %v141, %v140
    %v153 = vpack.c.b16 %v143, %v142
    %v154 = vpack.c.b16 %v145, %v144
    %v155 = vpack.c.b16 %v147, %v146
    %164 = vmatprep.subr.bf16.mxu0 0
    %165 = vmatpush1.bf16.msra.mxu0 %v148
    %166 = vmatprep.subr.bf16.mxu0 0
    %167 = vmatpush1.bf16.msra.mxu0 %v149
    %168 = vmatprep.subr.bf16.mxu0 0
    %169 = vmatpush1.bf16.msra.mxu0 %v150
    %170 = vmatprep.subr.bf16.mxu0 0
    %171 = vmatpush1.bf16.msra.mxu0 %v151
    %172 = vmatprep.subr.bf16.mxu0 0
    %173 = vmatpush1.bf16.msra.mxu0 %v152
    %174 = vmatprep.subr.bf16.mxu0 0
    %175 = vmatpush1.bf16.msra.mxu0 %v153
    %176 = vmatprep.subr.bf16.mxu0 0
    %177 = vmatpush1.bf16.msra.mxu0 %v154
    %178 = vmatprep.subr.bf16.mxu0 0
    %179 = vmatpush1.bf16.msra.mxu0 %v155
    %180 = vmatprep.subr.bf16.mxu0 0
    %181 = vmatpush1.bf16.msra.mxu0 0
    %182 = vmatprep.subr.bf16.mxu0 0
    %183 = vmatpush1.bf16.msra.mxu0 0
    %184 = vmatprep.subr.bf16.mxu0 0
    %185 = vmatpush1.bf16.msra.mxu0 0
    %186 = vmatprep.subr.bf16.mxu0 0
    %187 = vmatpush1.bf16.msra.mxu0 0
    %188 = vmatprep.subr.bf16.mxu0 0
    %189 = vmatpush1.bf16.msra.mxu0 0
    %190 = vmatprep.subr.bf16.mxu0 0
    %191 = vmatpush1.bf16.msra.mxu0 0
    %192 = vmatprep.subr.bf16.mxu0 0
    %193 = vmatpush1.bf16.msra.mxu0 0
    %194 = vmatprep.subr.bf16.mxu0 0
    %195 = vmatpush1.bf16.msra.mxu0 0
    %196 = vmatprep.mubr.bf16.mxu0 0
    %197 = vmatmul.mubr.bf16.gmra.mrb[0].mxu0 %v94
    %v198 = vpop.f32.mrb[0].mxu0
    %v199 = vadd.f32 %v115, %v198
    %v200 = vpop.f32.mrb[0].mxu0
    %v201 = vpop.f32.mrb[0].mxu0
    %v202 = vpop.f32.mrb[0].mxu0
    %203 = vdwg.mxu0
    %v204 = vmul.f32 %v199, 0.5
    %v205 = vtanh.pop %v204
    %v206 = vmul.f32 %v205, 0.5
    %v207 = vadd.f32 %v206, 0.5
    %v208 = vpack.c.bf16 %v207, %v207
    %v209 = vld [vmem:[#allocation7] sm:$0xf]
    %v210 = vld [vmem:[#allocation7 + $0x4] sm:$0xf]
    %v211 = vld [vmem:[#allocation7 + $0x8] sm:$0xf]
    %v212 = vld [vmem:[#allocation7 + $0xc] sm:$0xf]
    %v213 = vld [vmem:[#allocation7 + $0x10] sm:$0xf]
    %v214 = vld [vmem:[#allocation7 + $0x14] sm:$0xf]
    %v215 = vld [vmem:[#allocation7 + $0x18] sm:$0xf]
    %v216 = vld [vmem:[#allocation7 + $0x1c] sm:$0xf]
    %v217 = vld [vmem:[#allocation7 + $0x20] sm:$0xf]
    %v218 = vld [vmem:[#allocation7 + $0x24] sm:$0xf]
    %v219 = vld [vmem:[#allocation7 + $0x28] sm:$0xf]
    %v220 = vld [vmem:[#allocation7 + $0x2c] sm:$0xf]
    %v221 = vld [vmem:[#allocation7 + $0x30] sm:$0xf]
    %v222 = vld [vmem:[#allocation7 + $0x34] sm:$0xf]
    %v223 = vld [vmem:[#allocation7 + $0x38] sm:$0xf]
    %v224 = vld [vmem:[#allocation7 + $0x3c] sm:$0xf]
    %v225 = vld [vmem:[%s5 + $0x1] sm:$0x1]
    %v226 = vlaneseq
    %v227 = vshrl.u32 %v226, 7
    %v228 = vsub.s32 0, %v227
    %v229 = vrot.slane %v225, %v228
    %v246 = vunpack.c.l.b16 %v209
    %v247 = vunpack.c.l.b16 %v210
    %v248 = vunpack.c.l.b16 %v211
    %v249 = vunpack.c.l.b16 %v212
    %v250 = vunpack.c.l.b16 %v213
    %v251 = vunpack.c.l.b16 %v214
    %v252 = vunpack.c.l.b16 %v215
    %v253 = vunpack.c.l.b16 %v216
    %v254 = vunpack.c.l.b16 %v217
    %v255 = vunpack.c.l.b16 %v218
    %v256 = vunpack.c.l.b16 %v219
    %v257 = vunpack.c.l.b16 %v220
    %v258 = vunpack.c.l.b16 %v221
    %v259 = vunpack.c.l.b16 %v222
    %v260 = vunpack.c.l.b16 %v223
    %v261 = vunpack.c.l.b16 %v224
    %v262 = vpack.c.b16 %v247, %v246
    %v263 = vpack.c.b16 %v249, %v248
    %v264 = vpack.c.b16 %v251, %v250
    %v265 = vpack.c.b16 %v253, %v252
    %v266 = vpack.c.b16 %v255, %v254
    %v267 = vpack.c.b16 %v257, %v256
    %v268 = vpack.c.b16 %v259, %v258
    %v269 = vpack.c.b16 %v261, %v260
    %278 = vmatprep.subr.bf16.mxu0 0
    %279 = vmatpush1.bf16.msra.mxu0 %v262
    %280 = vmatprep.subr.bf16.mxu0 0
    %281 = vmatpush1.bf16.msra.mxu0 %v263
    %282 = vmatprep.subr.bf16.mxu0 0
    %283 = vmatpush1.bf16.msra.mxu0 %v264
    %284 = vmatprep.subr.bf16.mxu0 0
    %285 = vmatpush1.bf16.msra.mxu0 %v265
    %286 = vmatprep.subr.bf16.mxu0 0
    %287 = vmatpush1.bf16.msra.mxu0 %v266
    %288 = vmatprep.subr.bf16.mxu0 0
    %289 = vmatpush1.bf16.msra.mxu0 %v267
    %290 = vmatprep.subr.bf16.mxu0 0
    %291 = vmatpush1.bf16.msra.mxu0 %v268
    %292 = vmatprep.subr.bf16.mxu0 0
    %293 = vmatpush1.bf16.msra.mxu0 %v269
    %294 = vmatprep.subr.bf16.mxu0 0
    %295 = vmatpush1.bf16.msra.mxu0 0
    %296 = vmatprep.subr.bf16.mxu0 0
    %297 = vmatpush1.bf16.msra.mxu0 0
    %298 = vmatprep.subr.bf16.mxu0 0
    %299 = vmatpush1.bf16.msra.mxu0 0
    %300 = vmatprep.subr.bf16.mxu0 0
    %301 = vmatpush1.bf16.msra.mxu0 0
    %302 = vmatprep.subr.bf16.mxu0 0
    %303 = vmatpush1.bf16.msra.mxu0 0
    %304 = vmatprep.subr.bf16.mxu0 0
    %305 = vmatpush1.bf16.msra.mxu0 0
    %306 = vmatprep.subr.bf16.mxu0 0
    %307 = vmatpush1.bf16.msra.mxu0 0
    %308 = vmatprep.subr.bf16.mxu0 0
    %309 = vmatpush1.bf16.msra.mxu0 0
    %310 = vmatprep.mubr.bf16.mxu0 0
    %311 = vmatmul.mubr.bf16.gmra.mrb[0].mxu0 %v208
    %v312 = vpop.f32.mrb[0].mxu0
    %v313 = vadd.f32 %v229, %v312
    %v314 = vpop.f32.mrb[0].mxu0
    %v315 = vpop.f32.mrb[0].mxu0
    %v316 = vpop.f32.mrb[0].mxu0
    %317 = vdwg.mxu0
    %v318 = vpack.c.bf16 %v313, %v313
    %v319 = vld [vmem:[#allocation10] sm:$0xf]
    %v320 = vld [vmem:[#allocation10 + $0x4] sm:$0xf]
    %v321 = vld [vmem:[#allocation10 + $0x8] sm:$0xf]
    %v322 = vld [vmem:[#allocation10 + $0xc] sm:$0xf]
    %v323 = vld [vmem:[#allocation10 + $0x10] sm:$0xf]
    %v324 = vld [vmem:[#allocation10 + $0x14] sm:$0xf]
    %v325 = vld [vmem:[#allocation10 + $0x18] sm:$0xf]
    %v326 = vld [vmem:[#allocation10 + $0x1c] sm:$0xf]
    %v327 = vld [vmem:[#allocation10 + $0x20] sm:$0xf]
    %v328 = vld [vmem:[#allocation10 + $0x24] sm:$0xf]
    %v329 = vld [vmem:[#allocation10 + $0x28] sm:$0xf]
    %v330 = vld [vmem:[#allocation10 + $0x2c] sm:$0xf]
    %v331 = vld [vmem:[#allocation10 + $0x30] sm:$0xf]
    %v332 = vld [vmem:[#allocation10 + $0x34] sm:$0xf]
    %v333 = vld [vmem:[#allocation10 + $0x38] sm:$0xf]
    %v334 = vld [vmem:[#allocation10 + $0x3c] sm:$0xf]
    %v335 = vld [vmem:[%s6 + $0x1] sm:$0x1]
    %v336 = vlaneseq
    %v337 = vshrl.u32 %v336, 7
    %v338 = vsub.s32 0, %v337
    %v339 = vrot.slane %v335, %v338
    %v356 = vunpack.c.l.b16 %v319
    %v357 = vunpack.c.l.b16 %v320
    %v358 = vunpack.c.l.b16 %v321
    %v359 = vunpack.c.l.b16 %v322
    %v360 = vunpack.c.l.b16 %v323
    %v361 = vunpack.c.l.b16 %v324
    %v362 = vunpack.c.l.b16 %v325
    %v363 = vunpack.c.l.b16 %v326
    %v364 = vunpack.c.l.b16 %v327
    %v365 = vunpack.c.l.b16 %v328
    %v366 = vunpack.c.l.b16 %v329
    %v367 = vunpack.c.l.b16 %v330
    %v368 = vunpack.c.l.b16 %v331
    %v369 = vunpack.c.l.b16 %v332
    %v370 = vunpack.c.l.b16 %v333
    %v371 = vunpack.c.l.b16 %v334
    %v372 = vpack.c.b16 %v357, %v356
    %v373 = vpack.c.b16 %v359, %v358
    %v374 = vpack.c.b16 %v361, %v360
    %v375 = vpack.c.b16 %v363, %v362
    %v376 = vpack.c.b16 %v365, %v364
    %v377 = vpack.c.b16 %v367, %v366
    %v378 = vpack.c.b16 %v369, %v368
    %v379 = vpack.c.b16 %v371, %v370
    %388 = vmatprep.subr.bf16.mxu0 0
    %389 = vmatpush1.bf16.msra.mxu0 %v372
    %390 = vmatprep.subr.bf16.mxu0 0
    %391 = vmatpush1.bf16.msra.mxu0 %v373
    %392 = vmatprep.subr.bf16.mxu0 0
    %393 = vmatpush1.bf16.msra.mxu0 %v374
    %394 = vmatprep.subr.bf16.mxu0 0
    %395 = vmatpush1.bf16.msra.mxu0 %v375
    %396 = vmatprep.subr.bf16.mxu0 0
    %397 = vmatpush1.bf16.msra.mxu0 %v376
    %398 = vmatprep.subr.bf16.mxu0 0
    %399 = vmatpush1.bf16.msra.mxu0 %v377
    %400 = vmatprep.subr.bf16.mxu0 0
    %401 = vmatpush1.bf16.msra.mxu0 %v378
    %402 = vmatprep.subr.bf16.mxu0 0
    %403 = vmatpush1.bf16.msra.mxu0 %v379
    %404 = vmatprep.subr.bf16.mxu0 0
    %405 = vmatpush1.bf16.msra.mxu0 0
    %406 = vmatprep.subr.bf16.mxu0 0
    %407 = vmatpush1.bf16.msra.mxu0 0
    %408 = vmatprep.subr.bf16.mxu0 0
    %409 = vmatpush1.bf16.msra.mxu0 0
    %410 = vmatprep.subr.bf16.mxu0 0
    %411 = vmatpush1.bf16.msra.mxu0 0
    %412 = vmatprep.subr.bf16.mxu0 0
    %413 = vmatpush1.bf16.msra.mxu0 0
    %414 = vmatprep.subr.bf16.mxu0 0
    %415 = vmatpush1.bf16.msra.mxu0 0
    %416 = vmatprep.subr.bf16.mxu0 0
    %417 = vmatpush1.bf16.msra.mxu0 0
    %418 = vmatprep.subr.bf16.mxu0 0
    %419 = vmatpush1.bf16.msra.mxu0 0
    %420 = vmatprep.mubr.bf16.mxu0 0
    %421 = vmatmul.mubr.bf16.gmra.mrb[0].mxu0 %v318
    %v422 = vpop.f32.mrb[0].mxu0
    %v423 = vadd.f32 %v339, %v422
    %v424 = vpop.f32.mrb[0].mxu0
    %v425 = vpop.f32.mrb[0].mxu0
    %v426 = vpop.f32.mrb[0].mxu0
    %427 = vdwg.mxu0
    %v428 = vmul.f32 %v423, 0.5
    %v429 = vtanh.pop %v428
    %v430 = vmul.f32 %v429, 0.5
    %v431 = vadd.f32 %v430, 0.5
    %v432 = vpack.c.bf16 %v431, %v431
    %v433 = vld [vmem:[#allocation8] sm:$0xf]
    %v434 = vld [vmem:[#allocation8 + $0x4] sm:$0xf]
    %v435 = vld [vmem:[#allocation8 + $0x8] sm:$0xf]
    %v436 = vld [vmem:[#allocation8 + $0xc] sm:$0xf]
    %v437 = vld [vmem:[#allocation8 + $0x10] sm:$0xf]
    %v438 = vld [vmem:[#allocation8 + $0x14] sm:$0xf]
    %v439 = vld [vmem:[#allocation8 + $0x18] sm:$0xf]
    %v440 = vld [vmem:[#allocation8 + $0x1c] sm:$0xf]
    %v441 = vld [vmem:[#allocation8 + $0x20] sm:$0xf]
    %v442 = vld [vmem:[#allocation8 + $0x24] sm:$0xf]
    %v443 = vld [vmem:[#allocation8 + $0x28] sm:$0xf]
    %v444 = vld [vmem:[#allocation8 + $0x2c] sm:$0xf]
    %v445 = vld [vmem:[#allocation8 + $0x30] sm:$0xf]
    %v446 = vld [vmem:[#allocation8 + $0x34] sm:$0xf]
    %v447 = vld [vmem:[#allocation8 + $0x38] sm:$0xf]
    %v448 = vld [vmem:[#allocation8 + $0x3c] sm:$0xf]
    %v449 = vld [vmem:[%s6] sm:$0x1]
    %v450 = vlaneseq
    %v451 = vshrl.u32 %v450, 7
    %v452 = vsub.s32 0, %v451
    %v453 = vrot.slane %v449, %v452
    %v470 = vunpack.c.l.b16 %v433
    %v471 = vunpack.c.l.b16 %v434
    %v472 = vunpack.c.l.b16 %v435
    %v473 = vunpack.c.l.b16 %v436
    %v474 = vunpack.c.l.b16 %v437
    %v475 = vunpack.c.l.b16 %v438
    %v476 = vunpack.c.l.b16 %v439
    %v477 = vunpack.c.l.b16 %v440
    %v478 = vunpack.c.l.b16 %v441
    %v479 = vunpack.c.l.b16 %v442
    %v480 = vunpack.c.l.b16 %v443
    %v481 = vunpack.c.l.b16 %v444
    %v482 = vunpack.c.l.b16 %v445
    %v483 = vunpack.c.l.b16 %v446
    %v484 = vunpack.c.l.b16 %v447
    %v485 = vunpack.c.l.b16 %v448
    %v486 = vpack.c.b16 %v471, %v470
    %v487 = vpack.c.b16 %v473, %v472
    %v488 = vpack.c.b16 %v475, %v474
    %v489 = vpack.c.b16 %v477, %v476
    %v490 = vpack.c.b16 %v479, %v478
    %v491 = vpack.c.b16 %v481, %v480
    %v492 = vpack.c.b16 %v483, %v482
    %v493 = vpack.c.b16 %v485, %v484
    %502 = vmatprep.subr.bf16.mxu0 0
    %503 = vmatpush1.bf16.msra.mxu0 %v486
    %504 = vmatprep.subr.bf16.mxu0 0
    %505 = vmatpush1.bf16.msra.mxu0 %v487
    %506 = vmatprep.subr.bf16.mxu0 0
    %507 = vmatpush1.bf16.msra.mxu0 %v488
    %508 = vmatprep.subr.bf16.mxu0 0
    %509 = vmatpush1.bf16.msra.mxu0 %v489
    %510 = vmatprep.subr.bf16.mxu0 0
    %511 = vmatpush1.bf16.msra.mxu0 %v490
    %512 = vmatprep.subr.bf16.mxu0 0
    %513 = vmatpush1.bf16.msra.mxu0 %v491
    %514 = vmatprep.subr.bf16.mxu0 0
    %515 = vmatpush1.bf16.msra.mxu0 %v492
    %516 = vmatprep.subr.bf16.mxu0 0
    %517 = vmatpush1.bf16.msra.mxu0 %v493
    %518 = vmatprep.subr.bf16.mxu0 0
    %519 = vmatpush1.bf16.msra.mxu0 0
    %520 = vmatprep.subr.bf16.mxu0 0
    %521 = vmatpush1.bf16.msra.mxu0 0
    %522 = vmatprep.subr.bf16.mxu0 0
    %523 = vmatpush1.bf16.msra.mxu0 0
    %524 = vmatprep.subr.bf16.mxu0 0
    %525 = vmatpush1.bf16.msra.mxu0 0
    %526 = vmatprep.subr.bf16.mxu0 0
    %527 = vmatpush1.bf16.msra.mxu0 0
    %528 = vmatprep.subr.bf16.mxu0 0
    %529 = vmatpush1.bf16.msra.mxu0 0
    %530 = vmatprep.subr.bf16.mxu0 0
    %531 = vmatpush1.bf16.msra.mxu0 0
    %532 = vmatprep.subr.bf16.mxu0 0
    %533 = vmatpush1.bf16.msra.mxu0 0
    %534 = vmatprep.mubr.bf16.mxu0 0
    %535 = vmatmul.mubr.bf16.gmra.mrb[0].mxu0 %v432
    %v536 = vpop.f32.mrb[0].mxu0
    %v537 = vadd.f32 %v453, %v536
    %v538 = vpop.f32.mrb[0].mxu0
    %v539 = vpop.f32.mrb[0].mxu0
    %v540 = vpop.f32.mrb[0].mxu0
    %541 = vdwg.mxu0
    %v542 = vmul.f32 %v537, 0.5
    %v543 = vtanh.pop %v542
    %v544 = vmul.f32 %v543, 0.5
    %v545 = vadd.f32 %v544, 0.5
    %v546 = vpack.c.bf16 %v545, %v545
    %547 = vst [vmem:[#allocation11] sm:$0xf] %v546
    // Predicated region
    $region50: #{tpu_custom_call.1} parent=1 // pred_check
      _
    $region51: #{tpu_custom_call.1} parent=1 // pred_check_branch
      %549 = sbr.rel (0) target = $region53
    $region52: #{tpu_custom_call.1} parent=1 // pred_region
      %s551 = ssub.s32 64, 64
      %552 = vsyncadd [#allocation4], %s551
      %s554 = sshll.u32 [#allocation11], 4
      %s555 = int_to_ptr.vmem [resolvable:$true] %s554
      %557 = dma.vmem_to_hbm [thread:$0]  %s555, 64, %s7, [#allocation4]
    $region53: #{tpu_custom_call.1} parent=1 // pred_fallthru
      _
    // Predicated region
    $region54: #{tpu_custom_call.1} parent=1 // pred_check
      _
    $region55: #{tpu_custom_call.1} parent=1 // pred_check_branch
      %559 = sbr.rel (0) target = $region57
    $region56: #{tpu_custom_call.1} parent=1 // pred_region
      %560 = dma.done [#allocation4], 64
    $region57: #{tpu_custom_call.1} parent=1 // pred_fallthru
      _
    %561 = vsyncpa [#allocation3], 1
    %562 = vsyncpa [#allocation6], 1
    %563 = vsyncpa [#allocation9], 1
    %564 = vsyncpa [#allocation4], 1

</llo_original>
